<compile_context>
chip_gen: v7x
topology: tpu7x:2x2x1
jax: 0.10.0
libtpu: 0.0.40
codegen_flags: <defaults>
</compile_context>

<pallas_src>
import jax
import jax.numpy as jnp
from jax.experimental import pallas as pl
from jax.experimental.pallas import tpu as pltpu


def _round_up(x, m):
    return (x + m - 1) // m * m


def _make_mlp_kernel(row_sizes, out_dim):
    """Fused bias-free MLP: (h @ W0 -> ReLU) ... -> h @ Wn, all in VMEM.

    row_sizes[i] = number of (padded) rows layer i occupies in the packed
    weight slab.  All slices below are static and 16-row aligned.
    """
    num_layers = len(row_sizes)

    def kernel(x_ref, w_ref, o_ref):
        h = x_ref[...]                           # bf16 [b, row_sizes[0]]
        off = 0
        for i, rows in enumerate(row_sizes):
            w = w_ref[off:off + rows, :]         # static bf16 slice, tile-aligned
            # bf16 x bf16 -> f32 accumulation: single MXU pass on every chip.
            h = jnp.dot(h, w, preferred_element_type=jnp.float32)
            if i < num_layers - 1:
                h = jnp.maximum(h, 0.0)          # ReLU in f32
                h = h.astype(jnp.bfloat16)       # bf16 operand for next MXU pass
            off += rows
        o_ref[...] = h[:, :out_dim].astype(o_ref.dtype)

    return kernel


def _pack_weights(weights):
    """Pack all layer weights into one lane-dense bf16 slab (single input DMA).

    weights[i]: [d_in, d_out] (already transposed vs. nn.Linear's [out, in]).
    Zero-padding rows/cols contribute exact zeros, so semantics are unchanged.
    Returns (packed_slab [sum_rows, lane_pad] bf16, row_sizes, out_dim).
    """
    d_in0 = weights[0].shape[0]
    out_dim = weights[-1].shape[1]
    lane_pad = _round_up(max(w.shape[1] for w in weights), 128)
    # 16-row alignment so every static layer slice starts on a (16,128) bf16 tile.
    r0 = _round_up(d_in0, 16)
    # Hidden layers are padded to lane_pad rows so they match the (zero-padded)
    # lane width of the previous layer's activations.
    row_sizes = (r0,) + (lane_pad,) * (len(weights) - 1)

    blocks = []
    for w, rows in zip(weights, row_sizes):
        d_in, d_out = w.shape
        blk = jnp.zeros((rows, lane_pad), jnp.bfloat16)
        blk = blk.at[:d_in, :d_out].set(w.astype(jnp.bfloat16))
        blocks.append(blk)
    packed = jnp.concatenate(blocks, axis=0)
    return packed, row_sizes, out_dim


def make_style_tag_encoder(weights, *, batch_block=128):
    """Build a jitted forward(x) for the given layer weights."""
    packed_w, row_sizes, out_dim = _pack_weights(weights)
    r0 = row_sizes[0]
    d_in0 = weights[0].shape[0]
    kernel = _make_mlp_kernel(row_sizes, out_dim)
    w_shape = packed_w.shape

    @jax.jit
    def forward(x):
        B, d_in = x.shape
        assert d_in == d_in0, "input feature size mismatch"

        # bf16 activations into the MXU (also halves the x DMA); pad lanes up
        # to the slab's first-layer row count if needed (no-op here).
        x_in = x.astype(jnp.bfloat16)
        if r0 != d_in:
            x_in = jnp.pad(x_in, ((0, 0), (0, r0 - d_in)))

        if B > batch_block and B % batch_block == 0:
            # Batch grid: weight slab maps to block (0,0) every step (stays
            # resident); "parallel" lets v7x shard across both TensorCores.
            grid = (B // batch_block,)
            in_specs = [
                pl.BlockSpec((batch_block, r0), lambda i: (i, 0)),
                pl.BlockSpec(w_shape, lambda i: (0, 0)),
            ]
            out_specs = pl.BlockSpec((batch_block, out_dim), lambda i: (i, 0))
            extra = dict(
                compiler_params=pltpu.CompilerParams(
                    dimension_semantics=("parallel",)
                )
            )
        else:
            # Tiny batch: single program, whole problem resident in VMEM.
            grid = ()
            in_specs = [
                pl.BlockSpec((B, r0), lambda: (0, 0)),
                pl.BlockSpec(w_shape, lambda: (0, 0)),
            ]
            out_specs = pl.BlockSpec((B, out_dim), lambda: (0, 0))
            extra = {}

        return pl.pallas_call(
            kernel,
            out_shape=jax.ShapeDtypeStruct((B, out_dim), x.dtype),
            grid=grid,
            in_specs=in_specs,
            out_specs=out_specs,
            **extra,
        )(x_in, packed_w)

    return forward


def init_params(key, input_bert_size, adaptation_fc_layer, output_size):
    """Deterministic bias-free Linear weights, stored as [D_in, D_out]."""
    sizes = [input_bert_size] + list(adaptation_fc_layer) + [output_size]
    weights = []
    for i in range(len(sizes) - 1):
        key, sub = jax.random.split(key)
        d_in, d_out = sizes[i], sizes[i + 1]
        bound = 1.0 / (d_in ** 0.5)
        w = jax.random.uniform(sub, (d_in, d_out), jnp.float32, -bound, bound)
        weights.append(w)
    return weights


def reference_forward_bf16(x, weights):
    """Mirrors the kernel's numerics: bf16 operands, f32 accumulation."""
    h = x.astype(jnp.bfloat16)
    for i, w in enumerate(weights):
        h = jnp.dot(h, w.astype(jnp.bfloat16), preferred_element_type=jnp.float32)
        if i < len(weights) - 1:
            h = jnp.maximum(h, 0.0).astype(jnp.bfloat16)
    return h.astype(x.dtype)


def reference_forward_f32(x, weights):
    h = x
    for i, w in enumerate(weights):
        h = h @ w
        if i < len(weights) - 1:
            h = jnp.maximum(h, 0.0)
    return h


if __name__ == "__main__":
    # Synthetic config (mirrors model_config['styleTag_encoder'] / ['gst']).
    model_config = {
        "styleTag_encoder": {
            "input_bert_size": 64,
            "adaptation_fc_layer": [128, 64],
        },
        "gst": {"gru_hidden": 32},
    }

    key = jax.random.PRNGKey(0)
    k_x, k_w, k_x2 = jax.random.split(key, 3)

    weights = init_params(
        k_w,
        model_config["styleTag_encoder"]["input_bert_size"],
        model_config["styleTag_encoder"]["adaptation_fc_layer"],
        model_config["gst"]["gru_hidden"],
    )
    # One-time weight packing + jitted forward (constant across calls).
    forward = make_style_tag_encoder(weights)
    out_dim = model_config["gst"]["gru_hidden"]

    # --- small batch: gridless single-program path ---
    B = 8
    x = jax.random.normal(
        k_x, (B, model_config["styleTag_encoder"]["input_bert_size"]), jnp.float32
    )
    out = jax.block_until_ready(forward(x))
    assert out.shape == (B, out_dim)
    assert jnp.allclose(out, reference_forward_bf16(x, weights), atol=1e-3, rtol=1e-3), \
        "mismatch vs bf16 reference"
    assert jnp.allclose(out, reference_forward_f32(x, weights), atol=2e-2, rtol=5e-2), \
        "mismatch vs f32 reference"

    # --- larger batch: batch-gridded "parallel" path (v7x two-TC sharding) ---
    B2 = 256
    x2 = jax.random.normal(
        k_x2, (B2, model_config["styleTag_encoder"]["input_bert_size"]), jnp.float32
    )
    out2 = jax.block_until_ready(forward(x2))
    assert out2.shape == (B2, out_dim)
    assert jnp.allclose(out2, reference_forward_bf16(x2, weights), atol=1e-3, rtol=1e-3)
    assert jnp.allclose(out2, reference_forward_f32(x2, weights), atol=2e-2, rtol=5e-2)

    print("KERNEL_OK")
</pallas_src>

<mosaic_0001>
module attributes {stable_mosaic.version = 11 : i64} {
  func.func @kernel(%arg0: memref<8x64xbf16, #tpu.memory_space<vmem>>, %arg1: memref<320x128xbf16, #tpu.memory_space<vmem>>, %arg2: memref<8x32xf32, #tpu.memory_space<vmem>>) attributes {dimension_semantics = [], scalar_prefetch = 0 : i64, scratch_operands = 0 : i64, tpu.core_type = #tpu.core_type<tc>} {
    %c0 = arith.constant 0 : index
    %c0_0 = arith.constant 0 : index
    %0 = vector.load %arg0[%c0, %c0_0] : memref<8x64xbf16, #tpu.memory_space<vmem>>, vector<8x64xbf16>
    %c0_1 = arith.constant 0 : index
    %c0_2 = arith.constant 0 : index
    %1 = vector.load %arg1[%c0_1, %c0_2] : memref<320x128xbf16, #tpu.memory_space<vmem>>, vector<64x128xbf16>
    %cst = arith.constant dense<0.000000e+00> : vector<8x128xf32>
    %2 = tpu.matmul %0, %1, %cst {dimension_numbers = #tpu.dot_dimension_numbers<[1], [0], [0], [1], [0, 0, 1, 1], [], []>} : vector<8x64xbf16>, vector<64x128xbf16>, vector<8x128xf32> -> vector<8x128xf32>
    %cst_3 = arith.constant 0.000000e+00 : f32
    %3 = vector.broadcast %cst_3 : f32 to vector<8x128xf32>
    %4 = arith.maximumf %2, %3 : vector<8x128xf32>
    %5 = arith.truncf %4 : vector<8x128xf32> to vector<8x128xbf16>
    %c64 = arith.constant 64 : index
    %c0_4 = arith.constant 0 : index
    %6 = vector.load %arg1[%c64, %c0_4] : memref<320x128xbf16, #tpu.memory_space<vmem>>, vector<128x128xbf16>
    %cst_5 = arith.constant dense<0.000000e+00> : vector<8x128xf32>
    %7 = tpu.matmul %5, %6, %cst_5 {dimension_numbers = #tpu.dot_dimension_numbers<[1], [0], [0], [1], [0, 0, 1, 1], [], []>} : vector<8x128xbf16>, vector<128x128xbf16>, vector<8x128xf32> -> vector<8x128xf32>
    %cst_6 = arith.constant 0.000000e+00 : f32
    %8 = vector.broadcast %cst_6 : f32 to vector<8x128xf32>
    %9 = arith.maximumf %7, %8 : vector<8x128xf32>
    %10 = arith.truncf %9 : vector<8x128xf32> to vector<8x128xbf16>
    %c192 = arith.constant 192 : index
    %c0_7 = arith.constant 0 : index
    %11 = vector.load %arg1[%c192, %c0_7] : memref<320x128xbf16, #tpu.memory_space<vmem>>, vector<128x128xbf16>
    %cst_8 = arith.constant dense<0.000000e+00> : vector<8x128xf32>
    %12 = tpu.matmul %10, %11, %cst_8 {dimension_numbers = #tpu.dot_dimension_numbers<[1], [0], [0], [1], [0, 0, 1, 1], [], []>} : vector<8x128xbf16>, vector<128x128xbf16>, vector<8x128xf32> -> vector<8x128xf32>
    %13 = vector.extract_strided_slice %12 {offsets = [0, 0], sizes = [8, 32], strides = [1, 1]} : vector<8x128xf32> to vector<8x32xf32>
    %c0_9 = arith.constant 0 : index
    %c0_10 = arith.constant 0 : index
    %14 = vector.load %arg2[%c0_9, %c0_10] : memref<8x32xf32, #tpu.memory_space<vmem>>, vector<8x32xf32>
    tpu.vector_store %arg2[%c0_9, %c0_10], %13 {strides = array<i32>} : memref<8x32xf32, #tpu.memory_space<vmem>>, vector<8x32xf32>,
    return
  }
}

</mosaic_0001>

<llo_original>
// kernel: forward.1
$region0: #{forward.1}
  #allocation0 [shape = 'u32[]', space=smem, size = 0x4, offset = 0x4, fixed_abs, tag = 'smem constant byte address 0x4 - core index']
  #allocation1 [shape = 'u32[144,128]{1,0:T(1,128)}', space=vmem, size = 0x12000, scoped, tag = 'internal scratch']
  %s0 = inlined_call_operand.vmem [shape: bf16[8,64], index: 0, kind: input, shape index: {}]
  %s1 = inlined_call_operand.hbm [shape: bf16[320,128], index: 1, kind: input, shape index: {}]
  %s2 = inlined_call_operand.hbm [shape: f32[8,32], index: 2, kind: output, shape index: {}]
  %s3 = sld [smem:[#allocation0]]
  $region22: #{forward.1} parent=0
    _
  %s5 = ssub.s32 1, %s3
  %s6 = scalar_select 0, %s5, %s3
  $region1: #{forward.1} parent=0
    #allocation2 [shape = 'u8[81920]{0}', space=vmem, size = 0x14000, scoped, tag = 'input window, operand 1, single buffered']
    #allocation3 [shape = 's32[1]{0}', space=sflag, size = 0x4, scoped, tag = 'scoped memory for forward.1']
    #allocation4 [shape = 's32[1]{0}', space=sflag, size = 0x4, scoped, tag = 'scoped memory for forward.1']
    #allocation5 [shape = 'u8[4096]{0}', space=vmem, size = 0x1000, scoped, tag = 'output window, operand 0, single buffered']
    %7 = vsyncpa [#allocation3], 0
    %8 = vsyncpa [#allocation4], 0
    // Predicated region
    $region2: #{forward.1} parent=1 // pred_check
      _
    $region3: #{forward.1} parent=1 // pred_check_branch
      %10 = sbr.rel (0) target = $region5
    $region4: #{forward.1} parent=1 // pred_region
      _
    $region5: #{forward.1} parent=1 // pred_fallthru
      _
    // Predicated region
    $region6: #{forward.1} parent=1 // pred_check
      _
    $region7: #{forward.1} parent=1 // pred_check_branch
      %12 = sbr.rel (0) target = $region9
    $region8: #{forward.1} parent=1 // pred_region
      %s14 = ssub.s32 2560, 2560
      %15 = vsyncadd [#allocation3], %s14
      %s16 = sshll.u32 [#allocation2], 4
      %s17 = int_to_ptr.vmem [resolvable:$true] %s16
      %22 = dma.hbm_to_vmem [thread:$0]  %s1, 2560, %s17, [#allocation3], 64, 64, 4
    $region9: #{forward.1} parent=1 // pred_fallthru
      _
    // Predicated region
    $region10: #{forward.1} parent=1 // pred_check
      _
    $region11: #{forward.1} parent=1 // pred_check_branch
      %24 = sbr.rel (0) target = $region13
    $region12: #{forward.1} parent=1 // pred_region
      %25 = dma.done [#allocation3], 2560
    $region13: #{forward.1} parent=1 // pred_fallthru
      _
    %v27 = vld [vmem:[%s0] sm:$0xf]
    %v28 = vld [vmem:[#allocation2] sm:$0xf]
    %v29 = vld [vmem:[#allocation2 + $0x4] sm:$0xf]
    %v30 = vld [vmem:[#allocation2 + $0x8] sm:$0xf]
    %v31 = vld [vmem:[#allocation2 + $0xc] sm:$0xf]
    %v32 = vld [vmem:[#allocation2 + $0x10] sm:$0xf]
    %v33 = vld [vmem:[#allocation2 + $0x14] sm:$0xf]
    %v34 = vld [vmem:[#allocation2 + $0x18] sm:$0xf]
    %v35 = vld [vmem:[#allocation2 + $0x1c] sm:$0xf]
    %v44 = vunpack.c.l.b16 %v28
    %v45 = vunpack.c.l.b16 %v29
    %v46 = vunpack.c.l.b16 %v30
    %v47 = vunpack.c.l.b16 %v31
    %v48 = vunpack.c.l.b16 %v32
    %v49 = vunpack.c.l.b16 %v33
    %v50 = vunpack.c.l.b16 %v34
    %v51 = vunpack.c.l.b16 %v35
    %v52 = vpack.c.b16 %v45, %v44
    %v53 = vpack.c.b16 %v47, %v46
    %v54 = vpack.c.b16 %v49, %v48
    %v55 = vpack.c.b16 %v51, %v50
    %vm60 = vcmask 523264
    %v62 = vsel %vm60, %v27, 0
    %64 = vmatprep.subr.bf16.mxu0 0
    %65 = vmatpush1.bf16.msra.mxu0 %v52
    %66 = vmatprep.subr.bf16.mxu0 0
    %67 = vmatpush1.bf16.msra.mxu0 %v53
    %68 = vmatprep.subr.bf16.mxu0 0
    %69 = vmatpush1.bf16.msra.mxu0 %v54
    %70 = vmatprep.subr.bf16.mxu0 0
    %71 = vmatpush1.bf16.msra.mxu0 %v55
    %72 = vmatprep.subr.bf16.mxu0 0
    %73 = vmatpush1.bf16.msra.mxu0 0
    %74 = vmatprep.subr.bf16.mxu0 0
    %75 = vmatpush1.bf16.msra.mxu0 0
    %76 = vmatprep.subr.bf16.mxu0 0
    %77 = vmatpush1.bf16.msra.mxu0 0
    %78 = vmatprep.subr.bf16.mxu0 0
    %79 = vmatpush1.bf16.msra.mxu0 0
    %80 = vmatprep.subr.bf16.mxu0 0
    %81 = vmatpush1.bf16.msra.mxu0 0
    %82 = vmatprep.subr.bf16.mxu0 0
    %83 = vmatpush1.bf16.msra.mxu0 0
    %84 = vmatprep.subr.bf16.mxu0 0
    %85 = vmatpush1.bf16.msra.mxu0 0
    %86 = vmatprep.subr.bf16.mxu0 0
    %87 = vmatpush1.bf16.msra.mxu0 0
    %88 = vmatprep.subr.bf16.mxu0 0
    %89 = vmatpush1.bf16.msra.mxu0 0
    %90 = vmatprep.subr.bf16.mxu0 0
    %91 = vmatpush1.bf16.msra.mxu0 0
    %92 = vmatprep.subr.bf16.mxu0 0
    %93 = vmatpush1.bf16.msra.mxu0 0
    %94 = vmatprep.subr.bf16.mxu0 0
    %95 = vmatpush1.bf16.msra.mxu0 0
    %96 = vmatprep.mubr.bf16.mxu0 0
    %97 = vmatmul.mubr.bf16.gmra.mrb[0].mxu0 %v62
    %v98 = vpop.f32.mrb[0].mxu0
    %v99 = vadd.f32 0.0, %v98
    %v100 = vpop.f32.mrb[0].mxu0
    %v101 = vpop.f32.mrb[0].mxu0
    %v102 = vpop.f32.mrb[0].mxu0
    %103 = vdwg.mxu0
    %v104 = vmax.f32 %v99, 0.0
    %v105 = vpack.c.bf16 %v104, %v104
    %v106 = vld [vmem:[#allocation2 + $0x20] sm:$0xf]
    %v107 = vld [vmem:[#allocation2 + $0x24] sm:$0xf]
    %v108 = vld [vmem:[#allocation2 + $0x28] sm:$0xf]
    %v109 = vld [vmem:[#allocation2 + $0x2c] sm:$0xf]
    %v110 = vld [vmem:[#allocation2 + $0x30] sm:$0xf]
    %v111 = vld [vmem:[#allocation2 + $0x34] sm:$0xf]
    %v112 = vld [vmem:[#allocation2 + $0x38] sm:$0xf]
    %v113 = vld [vmem:[#allocation2 + $0x3c] sm:$0xf]
    %v114 = vld [vmem:[#allocation2 + $0x40] sm:$0xf]
    %v115 = vld [vmem:[#allocation2 + $0x44] sm:$0xf]
    %v116 = vld [vmem:[#allocation2 + $0x48] sm:$0xf]
    %v117 = vld [vmem:[#allocation2 + $0x4c] sm:$0xf]
    %v118 = vld [vmem:[#allocation2 + $0x50] sm:$0xf]
    %v119 = vld [vmem:[#allocation2 + $0x54] sm:$0xf]
    %v120 = vld [vmem:[#allocation2 + $0x58] sm:$0xf]
    %v121 = vld [vmem:[#allocation2 + $0x5c] sm:$0xf]
    %v138 = vunpack.c.l.b16 %v106
    %v139 = vunpack.c.l.b16 %v107
    %v140 = vunpack.c.l.b16 %v108
    %v141 = vunpack.c.l.b16 %v109
    %v142 = vunpack.c.l.b16 %v110
    %v143 = vunpack.c.l.b16 %v111
    %v144 = vunpack.c.l.b16 %v112
    %v145 = vunpack.c.l.b16 %v113
    %v146 = vunpack.c.l.b16 %v114
    %v147 = vunpack.c.l.b16 %v115
    %v148 = vunpack.c.l.b16 %v116
    %v149 = vunpack.c.l.b16 %v117
    %v150 = vunpack.c.l.b16 %v118
    %v151 = vunpack.c.l.b16 %v119
    %v152 = vunpack.c.l.b16 %v120
    %v153 = vunpack.c.l.b16 %v121
    %v154 = vpack.c.b16 %v139, %v138
    %v155 = vpack.c.b16 %v141, %v140
    %v156 = vpack.c.b16 %v143, %v142
    %v157 = vpack.c.b16 %v145, %v144
    %v158 = vpack.c.b16 %v147, %v146
    %v159 = vpack.c.b16 %v149, %v148
    %v160 = vpack.c.b16 %v151, %v150
    %v161 = vpack.c.b16 %v153, %v152
    %170 = vmatprep.subr.bf16.mxu0 0
    %171 = vmatpush1.bf16.msra.mxu0 %v154
    %172 = vmatprep.subr.bf16.mxu0 0
    %173 = vmatpush1.bf16.msra.mxu0 %v155
    %174 = vmatprep.subr.bf16.mxu0 0
    %175 = vmatpush1.bf16.msra.mxu0 %v156
    %176 = vmatprep.subr.bf16.mxu0 0
    %177 = vmatpush1.bf16.msra.mxu0 %v157
    %178 = vmatprep.subr.bf16.mxu0 0
    %179 = vmatpush1.bf16.msra.mxu0 %v158
    %180 = vmatprep.subr.bf16.mxu0 0
    %181 = vmatpush1.bf16.msra.mxu0 %v159
    %182 = vmatprep.subr.bf16.mxu0 0
    %183 = vmatpush1.bf16.msra.mxu0 %v160
    %184 = vmatprep.subr.bf16.mxu0 0
    %185 = vmatpush1.bf16.msra.mxu0 %v161
    %186 = vmatprep.subr.bf16.mxu0 0
    %187 = vmatpush1.bf16.msra.mxu0 0
    %188 = vmatprep.subr.bf16.mxu0 0
    %189 = vmatpush1.bf16.msra.mxu0 0
    %190 = vmatprep.subr.bf16.mxu0 0
    %191 = vmatpush1.bf16.msra.mxu0 0
    %192 = vmatprep.subr.bf16.mxu0 0
    %193 = vmatpush1.bf16.msra.mxu0 0
    %194 = vmatprep.subr.bf16.mxu0 0
    %195 = vmatpush1.bf16.msra.mxu0 0
    %196 = vmatprep.subr.bf16.mxu0 0
    %197 = vmatpush1.bf16.msra.mxu0 0
    %198 = vmatprep.subr.bf16.mxu0 0
    %199 = vmatpush1.bf16.msra.mxu0 0
    %200 = vmatprep.subr.bf16.mxu0 0
    %201 = vmatpush1.bf16.msra.mxu0 0
    %202 = vmatprep.mubr.bf16.mxu0 0
    %203 = vmatmul.mubr.bf16.gmra.mrb[0].mxu0 %v105
    %v204 = vpop.f32.mrb[0].mxu0
    %v205 = vadd.f32 0.0, %v204
    %v206 = vpop.f32.mrb[0].mxu0
    %v207 = vpop.f32.mrb[0].mxu0
    %v208 = vpop.f32.mrb[0].mxu0
    %209 = vdwg.mxu0
    %v210 = vmax.f32 %v205, 0.0
    %v211 = vpack.c.bf16 %v210, %v210
    %v212 = vld [vmem:[#allocation2 + $0x60] sm:$0xf]
    %v213 = vld [vmem:[#allocation2 + $0x64] sm:$0xf]
    %v214 = vld [vmem:[#allocation2 + $0x68] sm:$0xf]
    %v215 = vld [vmem:[#allocation2 + $0x6c] sm:$0xf]
    %v216 = vld [vmem:[#allocation2 + $0x70] sm:$0xf]
    %v217 = vld [vmem:[#allocation2 + $0x74] sm:$0xf]
    %v218 = vld [vmem:[#allocation2 + $0x78] sm:$0xf]
    %v219 = vld [vmem:[#allocation2 + $0x7c] sm:$0xf]
    %v220 = vld [vmem:[#allocation2 + $0x80] sm:$0xf]
    %v221 = vld [vmem:[#allocation2 + $0x84] sm:$0xf]
    %v222 = vld [vmem:[#allocation2 + $0x88] sm:$0xf]
    %v223 = vld [vmem:[#allocation2 + $0x8c] sm:$0xf]
    %v224 = vld [vmem:[#allocation2 + $0x90] sm:$0xf]
    %v225 = vld [vmem:[#allocation2 + $0x94] sm:$0xf]
    %v226 = vld [vmem:[#allocation2 + $0x98] sm:$0xf]
    %v227 = vld [vmem:[#allocation2 + $0x9c] sm:$0xf]
    %v244 = vunpack.c.l.b16 %v212
    %v245 = vunpack.c.l.b16 %v213
    %v246 = vunpack.c.l.b16 %v214
    %v247 = vunpack.c.l.b16 %v215
    %v248 = vunpack.c.l.b16 %v216
    %v249 = vunpack.c.l.b16 %v217
    %v250 = vunpack.c.l.b16 %v218
    %v251 = vunpack.c.l.b16 %v219
    %v252 = vunpack.c.l.b16 %v220
    %v253 = vunpack.c.l.b16 %v221
    %v254 = vunpack.c.l.b16 %v222
    %v255 = vunpack.c.l.b16 %v223
    %v256 = vunpack.c.l.b16 %v224
    %v257 = vunpack.c.l.b16 %v225
    %v258 = vunpack.c.l.b16 %v226
    %v259 = vunpack.c.l.b16 %v227
    %v260 = vpack.c.b16 %v245, %v244
    %v261 = vpack.c.b16 %v247, %v246
    %v262 = vpack.c.b16 %v249, %v248
    %v263 = vpack.c.b16 %v251, %v250
    %v264 = vpack.c.b16 %v253, %v252
    %v265 = vpack.c.b16 %v255, %v254
    %v266 = vpack.c.b16 %v257, %v256
    %v267 = vpack.c.b16 %v259, %v258
    %276 = vmatprep.subr.bf16.mxu0 0
    %277 = vmatpush1.bf16.msra.mxu0 %v260
    %278 = vmatprep.subr.bf16.mxu0 0
    %279 = vmatpush1.bf16.msra.mxu0 %v261
    %280 = vmatprep.subr.bf16.mxu0 0
    %281 = vmatpush1.bf16.msra.mxu0 %v262
    %282 = vmatprep.subr.bf16.mxu0 0
    %283 = vmatpush1.bf16.msra.mxu0 %v263
    %284 = vmatprep.subr.bf16.mxu0 0
    %285 = vmatpush1.bf16.msra.mxu0 %v264
    %286 = vmatprep.subr.bf16.mxu0 0
    %287 = vmatpush1.bf16.msra.mxu0 %v265
    %288 = vmatprep.subr.bf16.mxu0 0
    %289 = vmatpush1.bf16.msra.mxu0 %v266
    %290 = vmatprep.subr.bf16.mxu0 0
    %291 = vmatpush1.bf16.msra.mxu0 %v267
    %292 = vmatprep.subr.bf16.mxu0 0
    %293 = vmatpush1.bf16.msra.mxu0 0
    %294 = vmatprep.subr.bf16.mxu0 0
    %295 = vmatpush1.bf16.msra.mxu0 0
    %296 = vmatprep.subr.bf16.mxu0 0
    %297 = vmatpush1.bf16.msra.mxu0 0
    %298 = vmatprep.subr.bf16.mxu0 0
    %299 = vmatpush1.bf16.msra.mxu0 0
    %300 = vmatprep.subr.bf16.mxu0 0
    %301 = vmatpush1.bf16.msra.mxu0 0
    %302 = vmatprep.subr.bf16.mxu0 0
    %303 = vmatpush1.bf16.msra.mxu0 0
    %304 = vmatprep.subr.bf16.mxu0 0
    %305 = vmatpush1.bf16.msra.mxu0 0
    %306 = vmatprep.subr.bf16.mxu0 0
    %307 = vmatpush1.bf16.msra.mxu0 0
    %308 = vmatprep.mubr.bf16.mxu0 0
    %309 = vmatmul.mubr.bf16.gmra.mrb[0].mxu0 %v211
    %v310 = vpop.f32.mrb[0].mxu0
    %v311 = vadd.f32 0.0, %v310
    %v312 = vpop.f32.mrb[0].mxu0
    %v313 = vpop.f32.mrb[0].mxu0
    %v314 = vpop.f32.mrb[0].mxu0
    %315 = vdwg.mxu0
    %vm316 = vcmask 261120
    %317 = vst.msk [vmem:[#allocation5] sm:$0xff] %vm316, %v311
    // Predicated region
    $region14: #{forward.1} parent=1 // pred_check
      _
    $region15: #{forward.1} parent=1 // pred_check_branch
      %319 = sbr.rel (0) target = $region17
    $region16: #{forward.1} parent=1 // pred_region
      %s321 = ssub.s32 128, 128
      %322 = vsyncadd [#allocation4], %s321
      %s324 = sshll.u32 [#allocation5], 4
      %s325 = int_to_ptr.vmem [resolvable:$true] %s324
      %327 = dma.vmem_to_hbm [thread:$0]  %s325, 128, %s2, [#allocation4]
    $region17: #{forward.1} parent=1 // pred_fallthru
      _
    // Predicated region
    $region18: #{forward.1} parent=1 // pred_check
      _
    $region19: #{forward.1} parent=1 // pred_check_branch
      %329 = sbr.rel (0) target = $region21
    $region20: #{forward.1} parent=1 // pred_region
      %330 = dma.done [#allocation4], 128
    $region21: #{forward.1} parent=1 // pred_fallthru
      _
    %331 = vsyncpa [#allocation3], 1
    %332 = vsyncpa [#allocation4], 1

</llo_original>
